<compile_context>
chip_gen: v7x
topology: tpu7x:2x2x1
jax: 0.10.0
libtpu: 0.0.40
codegen_flags: <defaults>
</compile_context>

<pallas_src>
import functools

import jax
import jax.numpy as jnp
from jax.experimental import pallas as pl
from jax.experimental.pallas import tpu as pltpu


def _ce_sum_kernel(logits_ref, target_ref, out_ref, acc_ref, *,
                   n_total, tile_n, tiles_per_core):
    """Accumulates the sum of per-row cross entropy for this core's batch slice."""
    c = pl.program_id(0)          # core (parallel) axis
    i = pl.program_id(1)          # batch-tile (reduction) axis

    # --- init column accumulator on the first tile of this core ---
    @pl.when(i == 0)
    def _():
        acc_ref[...] = jnp.zeros_like(acc_ref)

    x = logits_ref[...].astype(jnp.float32)      # (tile_n, C)
    tgt = target_ref[...]                        # (tile_n, 1) int32
    tn, ncls = x.shape

    # Logical (unclamped) tile index.  Rows past n_total (tail padding, or
    # duplicated tiles produced by the clamped index_map on the last core)
    # get valid=False and contribute exactly 0 via the select below.
    g = c * tiles_per_core + i
    row_ids = g * tile_n + jax.lax.broadcasted_iota(jnp.int32, (tn, 1), 0)
    valid = row_ids < n_total                    # (tile_n, 1) bool

    # Numerically stable log-sum-exp along the class (lane) axis.
    m = jnp.max(x, axis=-1, keepdims=True)                               # (tn, 1)
    lse = m + jnp.log(jnp.sum(jnp.exp(x - m), axis=-1, keepdims=True))   # (tn, 1)

    # Target logit via one-hot select (no gather on TPU).
    cls_ids = jax.lax.broadcasted_iota(jnp.int32, (tn, ncls), 1)         # (tn, C)
    tgt_logit = jnp.sum(jnp.where(cls_ids == tgt, x, 0.0), axis=-1, keepdims=True)

    ce = lse - tgt_logit                                                 # (tn, 1)
    # Column accumulator: no per-step cross-sublane reduction, short dep chain.
    # The select masks padded rows (NaN/Inf in the unselected branch is safe).
    acc_ref[...] += jnp.where(valid, ce, 0.0)

    # --- per-core epilogue: reduce the column to a scalar, write lane-dense ---
    @pl.when(i == tiles_per_core - 1)
    def _():
        s = jnp.sum(acc_ref[...])                # partial CE sum for this core
        out_ref[...] = jnp.full(out_ref.shape, s, dtype=out_ref.dtype)


def _tpu_device_kind():
    try:
        return jax.devices()[0].device_kind.lower()
    except Exception:
        return ""


def focal_loss(logits, target, *, gamma=0.0, tile_n=None):
    """logits: (N, C) float (f32 or bf16); target: (N,) int class ids. Returns scalar f32."""
    n, c = logits.shape
    target2d = target.astype(jnp.int32).reshape(n, 1)

    kind = _tpu_device_kind()
    is_v7 = ("v7" in kind) or ("7x" in kind)
    itemsize = jnp.dtype(logits.dtype).itemsize
    # Sub-32-bit dtypes pack along sublanes: round rows to the packed tile.
    row_align = 8 if itemsize >= 4 else (16 if itemsize == 2 else 32)

    if tile_n is None:
        # Generation-aware per-step VMEM working-set budget.  Counts the
        # double-buffered logits tile, the lane-padded (tile_n,1) int32 target
        # tile (x2 buffers), the (tile_n,1) f32 column accumulator, and ~3x the
        # f32 logits tile for in-kernel temporaries (x_f32, exp(x-m), one-hot
        # select).  v7x has only 64 MiB physical VMEM -> smaller budget.
        budget_bytes = (28 if is_v7 else 40) * 1024 * 1024
        per_row_bytes = (2 * c * itemsize        # logits input, double-buffered
                         + 2 * 128 * 4           # targets, lane-padded, x2 buffers
                         + 1 * 128 * 4           # f32 column accumulator scratch
                         + 3 * c * 4)            # f32 temporaries
        tile_n = budget_bytes // per_row_bytes
        tile_n = max(row_align, (int(tile_n) // row_align) * row_align)
    else:
        tile_n = max(8, ((int(tile_n) + 7) // 8) * 8)

    # Never use a tile taller than the (aligned) batch.
    n_pad = ((n + row_align - 1) // row_align) * row_align
    tile_n = int(max(8, min(tile_n, n_pad)))

    nt = -(-n // tile_n)                         # number of real batch tiles
    # v7x has 2 TensorCores per chip: split batch tiles across them via a
    # leading "parallel" grid axis.  v5e/v6e have 1 TC -> size-1 core axis.
    num_cores = min(2 if is_v7 else 1, nt)
    tiles_per_core = -(-nt // num_cores)

    def data_map(ci, ti):
        # Clamp so the last core's surplus steps re-read an in-bounds tile;
        # those rows are masked out in-kernel via the *logical* tile index.
        return (jnp.minimum(ci * tiles_per_core + ti, nt - 1), 0)

    vmem_limit = (48 if is_v7 else 64) * 1024 * 1024

    # TODO(synk): if profiles on v7x still show exposed DMA issue latency,
    # sweep pipeline_mode=pl.Buffered(3) on the logits BlockSpec.
    partial = pl.pallas_call(
        functools.partial(_ce_sum_kernel, n_total=n, tile_n=tile_n,
                          tiles_per_core=tiles_per_core),
        out_shape=jax.ShapeDtypeStruct((num_cores, 8, 128), jnp.float32),
        grid_spec=pltpu.PrefetchScalarGridSpec(
            num_scalar_prefetch=0,
            grid=(num_cores, tiles_per_core),
            in_specs=[
                pl.BlockSpec((tile_n, c), data_map),
                pl.BlockSpec((tile_n, 1), data_map),
            ],
            out_specs=pl.BlockSpec((1, 8, 128), lambda ci, ti: (ci, 0, 0)),
            scratch_shapes=[pltpu.VMEM((tile_n, 1), jnp.float32)],
        ),
        compiler_params=pltpu.CompilerParams(
            dimension_semantics=("parallel", "arbitrary"),
            vmem_limit_bytes=vmem_limit,
        ),
    )(logits, target2d)

    # Scalar focal epilogue in the wrapper (trivial XLA ops; keeps the kernel a
    # pure per-core CE-sum reduction on every generation).
    logp = jnp.sum(partial[:, 0, 0]) / jnp.float32(n)    # 'mean' reduction
    p = jnp.exp(-logp)
    return (1.0 - p) ** jnp.float32(gamma) * logp        # .mean() of a scalar == scalar


def _focal_loss_ref(logits, target, *, gamma=0.0):
    # pure-JAX reference for correctness checking
    x = logits.astype(jnp.float32)
    logz = jax.nn.logsumexp(x, axis=-1)
    tgt_logit = jnp.take_along_axis(
        x, target[:, None].astype(jnp.int32), axis=-1
    )[:, 0]
    logp = jnp.mean(logz - tgt_logit)
    p = jnp.exp(-logp)
    return (1.0 - p) ** jnp.float32(gamma) * logp


if __name__ == "__main__":
    key = jax.random.PRNGKey(0)
    k1, k2, k3 = jax.random.split(key, 3)

    # Small shapes; N deliberately NOT a multiple of the tile to exercise the
    # multi-tile accumulation path and the tail-row mask.
    N, C = 20, 128
    logits_f32 = jax.random.normal(k1, (N, C), dtype=jnp.float32)
    target = jax.random.randint(k2, (N,), 0, C, dtype=jnp.int32)

    # gamma=0 is the module default; also exercise a non-trivial gamma.
    for gamma in (0.0, 2.0):
        out = jax.block_until_ready(
            focal_loss(logits_f32, target, gamma=gamma, tile_n=8))  # 3 tiles, partial tail
        ref = _focal_loss_ref(logits_f32, target, gamma=gamma)
        assert jnp.allclose(out, ref, rtol=1e-5, atol=1e-5), (gamma, out, ref)

        # default (auto) tile path as well
        out2 = jax.block_until_ready(focal_loss(logits_f32, target, gamma=gamma))
        assert jnp.allclose(out2, ref, rtol=1e-5, atol=1e-5), (gamma, out2, ref)

    # bf16 logits stay bf16 in HBM (mem-bound win); per-tile f32 cast in VMEM.
    logits_bf16 = logits_f32.astype(jnp.bfloat16)
    out_bf16 = jax.block_until_ready(
        focal_loss(logits_bf16, target, gamma=2.0, tile_n=16))
    ref_bf16 = _focal_loss_ref(logits_bf16, target, gamma=2.0)
    assert jnp.allclose(out_bf16, ref_bf16, rtol=1e-4, atol=1e-4), (out_bf16, ref_bf16)

    # Non-multiple-of-128 class count (e.g. VOC: 21 classes) — full-extent lane dim.
    C2 = 21
    logits_voc = jax.random.normal(k3, (N, C2), dtype=jnp.float32)
    target_voc = jax.random.randint(k2, (N,), 0, C2, dtype=jnp.int32)
    out_voc = jax.block_until_ready(
        focal_loss(logits_voc, target_voc, gamma=2.0, tile_n=8))
    ref_voc = _focal_loss_ref(logits_voc, target_voc, gamma=2.0)
    assert jnp.allclose(out_voc, ref_voc, rtol=1e-5, atol=1e-5), (out_voc, ref_voc)

    # TODO(synk): torch CrossEntropyLoss `ignore_index` / per-class `weight`
    # are not replicated (module defaults: weight=None, no ignored targets).
    print("KERNEL_OK")
</pallas_src>

<mosaic_0001>
module attributes {stable_mosaic.version = 11 : i64} {
  func.func @_ce_sum_kernel(%arg0: i32, %arg1: i32, %arg2: memref<8x128xf32, #tpu.memory_space<vmem>>, %arg3: memref<8x1xi32, #tpu.memory_space<vmem>>, %arg4: memref<1x8x128xf32, #tpu.memory_space<vmem>>, %arg5: memref<8x1xf32, #tpu.memory_space<vmem>>) attributes {dimension_semantics = [#tpu.dimension_semantics<parallel>, #tpu.dimension_semantics<arbitrary>], iteration_bounds = array<i64: 1, 3>, scalar_prefetch = 0 : i64, scratch_operands = 1 : i64, tpu.core_type = #tpu.core_type<tc>, window_params = [{transform_indices = @transform_0, window_bounds = array<i64: 8, 128>}, {transform_indices = @transform_1, window_bounds = array<i64: 8, 1>}, {transform_indices = @transform_2, window_bounds = array<i64: 1, 8, 128>}]} {
    %c0_i32 = arith.constant 0 : i32
    %0 = arith.cmpi eq, %arg1, %c0_i32 : i32
    %1 = arith.extui %0 : i1 to i32
    %c0_i32_0 = arith.constant 0 : i32
    %2 = arith.cmpi ne, %1, %c0_i32_0 : i32
    scf.if %2 {
      %cst_13 = arith.constant 0.000000e+00 : f32
      %38 = vector.broadcast %cst_13 : f32 to vector<8x1xf32>
      %c0_14 = arith.constant 0 : index
      %c0_15 = arith.constant 0 : index
      %39 = vector.load %arg5[%c0_14, %c0_15] : memref<8x1xf32, #tpu.memory_space<vmem>>, vector<8x1xf32>
      tpu.vector_store %arg5[%c0_14, %c0_15], %38 {strides = array<i32>} : memref<8x1xf32, #tpu.memory_space<vmem>>, vector<8x1xf32>,
    } else {
    }
    %c0 = arith.constant 0 : index
    %c0_1 = arith.constant 0 : index
    %3 = vector.load %arg2[%c0, %c0_1] : memref<8x128xf32, #tpu.memory_space<vmem>>, vector<8x128xf32>
    %c0_2 = arith.constant 0 : index
    %c0_3 = arith.constant 0 : index
    %4 = vector.load %arg3[%c0_2, %c0_3] : memref<8x1xi32, #tpu.memory_space<vmem>>, vector<8x1xi32>
    %c3_i32 = arith.constant 3 : i32
    %5 = arith.muli %arg0, %c3_i32 : i32
    %6 = arith.addi %5, %arg1 : i32
    %c8_i32 = arith.constant 8 : i32
    %7 = arith.muli %6, %c8_i32 : i32
    %8 = tpu.iota {dimensions = array<i32: 0>} : vector<8x1xi32>
    %9 = vector.broadcast %7 : i32 to vector<8x1xi32>
    %10 = arith.addi %9, %8 : vector<8x1xi32>
    %c20_i32 = arith.constant 20 : i32
    %11 = vector.broadcast %c20_i32 : i32 to vector<8x1xi32>
    %12 = arith.cmpi slt, %10, %11 : vector<8x1xi32>
    %cst = arith.constant dense<0xFF800000> : vector<8xf32>
    %13 = vector.multi_reduction <maximumf>, %3, %cst [1] : vector<8x128xf32> to vector<8xf32>
    %14 = vector.shape_cast %13 : vector<8xf32> to vector<8x1xf32>
    %15 = vector.broadcast %14 : vector<8x1xf32> to vector<8x128xf32>
    %16 = arith.subf %3, %15 : vector<8x128xf32>
    %17 = math.exp %16 : vector<8x128xf32>
    %cst_4 = arith.constant dense<0.000000e+00> : vector<8xf32>
    %18 = vector.multi_reduction <add>, %17, %cst_4 [1] : vector<8x128xf32> to vector<8xf32>
    %19 = vector.shape_cast %18 : vector<8xf32> to vector<8x1xf32>
    %20 = math.log %19 : vector<8x1xf32>
    %21 = arith.addf %14, %20 : vector<8x1xf32>
    %22 = tpu.iota {dimensions = array<i32: 1>} : vector<8x128xi32>
    %23 = vector.broadcast %4 : vector<8x1xi32> to vector<8x128xi32>
    %24 = arith.cmpi eq, %22, %23 : vector<8x128xi32>
    %cst_5 = arith.constant 0.000000e+00 : f32
    %25 = vector.broadcast %cst_5 : f32 to vector<8x128xf32>
    %26 = arith.select %24, %3, %25 : vector<8x128xi1>, vector<8x128xf32>
    %cst_6 = arith.constant dense<0.000000e+00> : vector<8xf32>
    %27 = vector.multi_reduction <add>, %26, %cst_6 [1] : vector<8x128xf32> to vector<8xf32>
    %28 = vector.shape_cast %27 : vector<8xf32> to vector<8x1xf32>
    %29 = arith.subf %21, %28 : vector<8x1xf32>
    %c0_7 = arith.constant 0 : index
    %c0_8 = arith.constant 0 : index
    %30 = vector.load %arg5[%c0_7, %c0_8] : memref<8x1xf32, #tpu.memory_space<vmem>>, vector<8x1xf32>
    %cst_9 = arith.constant 0.000000e+00 : f32
    %31 = vector.broadcast %cst_9 : f32 to vector<8x1xf32>
    %32 = arith.select %12, %29, %31 : vector<8x1xi1>, vector<8x1xf32>
    %33 = arith.addf %30, %32 : vector<8x1xf32>
    %c0_10 = arith.constant 0 : index
    %c0_11 = arith.constant 0 : index
    %34 = vector.load %arg5[%c0_10, %c0_11] : memref<8x1xf32, #tpu.memory_space<vmem>>, vector<8x1xf32>
    tpu.vector_store %arg5[%c0_10, %c0_11], %33 {strides = array<i32>} : memref<8x1xf32, #tpu.memory_space<vmem>>, vector<8x1xf32>,
    %c2_i32 = arith.constant 2 : i32
    %35 = arith.cmpi eq, %arg1, %c2_i32 : i32
    %36 = arith.extui %35 : i1 to i32
    %c0_i32_12 = arith.constant 0 : i32
    %37 = arith.cmpi ne, %36, %c0_i32_12 : i32
    scf.if %37 {
      %c0_13 = arith.constant 0 : index
      %c0_14 = arith.constant 0 : index
      %38 = vector.load %arg5[%c0_13, %c0_14] : memref<8x1xf32, #tpu.memory_space<vmem>>, vector<8x1xf32>
      %39 = vector.shape_cast %38 : vector<8x1xf32> to vector<1x8x1xf32>
      %cst_15 = arith.constant dense<0.000000e+00> : vector<1xf32>
      %40 = vector.multi_reduction <add>, %39, %cst_15 [1, 2] : vector<1x8x1xf32> to vector<1xf32>
      %41 = vector.shape_cast %40 : vector<1xf32> to vector<1x1x1xf32>
      %42 = vector.extract %41[0, 0, 0] : f32 from vector<1x1x1xf32>
      %43 = vector.broadcast %42 : f32 to vector<1x8x128xf32>
      %c0_16 = arith.constant 0 : index
      %c0_17 = arith.constant 0 : index
      %c0_18 = arith.constant 0 : index
      %44 = vector.load %arg4[%c0_16, %c0_17, %c0_18] : memref<1x8x128xf32, #tpu.memory_space<vmem>>, vector<1x8x128xf32>
      tpu.vector_store %arg4[%c0_16, %c0_17, %c0_18], %43 {strides = array<i32>} : memref<1x8x128xf32, #tpu.memory_space<vmem>>, vector<1x8x128xf32>,
    } else {
    }
    return
  }
  func.func @transform_0(%arg0: i32, %arg1: i32) -> (i32, i32) {
    %c3_i32 = arith.constant 3 : i32
    %0 = arith.muli %arg0, %c3_i32 : i32
    %1 = arith.addi %0, %arg1 : i32
    %c2_i32 = arith.constant 2 : i32
    %2 = arith.minsi %1, %c2_i32 : i32
    %c0_i32 = arith.constant 0 : i32
    %c0_i32_0 = arith.constant 0 : i32
    return %2, %c0_i32 : i32, i32
  }
  func.func @transform_1(%arg0: i32, %arg1: i32) -> (i32, i32) {
    %c3_i32 = arith.constant 3 : i32
    %0 = arith.muli %arg0, %c3_i32 : i32
    %1 = arith.addi %0, %arg1 : i32
    %c2_i32 = arith.constant 2 : i32
    %2 = arith.minsi %1, %c2_i32 : i32
    %c0_i32 = arith.constant 0 : i32
    %c0_i32_0 = arith.constant 0 : i32
    return %2, %c0_i32 : i32, i32
  }
  func.func @transform_2(%arg0: i32, %arg1: i32) -> (i32, i32, i32) {
    %c0_i32 = arith.constant 0 : i32
    %c0_i32_0 = arith.constant 0 : i32
    %c0_i32_1 = arith.constant 0 : i32
    return %arg0, %c0_i32, %c0_i32_0 : i32, i32, i32
  }
}

</mosaic_0001>

<llo_original>
// kernel: tpu_custom_call.1
$region0: #{tpu_custom_call.1}
  #allocation0 [shape = 'u32[]', space=smem, size = 0x4, offset = 0x4, fixed_abs, tag = 'smem constant byte address 0x4 - core index']
  #allocation1 [shape = 'u32[144,128]{1,0:T(1,128)}', space=vmem, size = 0x12000, scoped, tag = 'internal scratch']
  #allocation2 [shape = 'f32[8,1]{1,0:T(8,128)}', space=vmem, size = 0x1000, scoped, tag = 'scratch operand']
  %s0 = inlined_call_operand.hbm [shape: f32[20,128], index: 0, kind: input, shape index: {}]
  %s1 = inlined_call_operand.hbm [shape: s32[20,1], index: 1, kind: input, shape index: {}]
  %s2 = inlined_call_operand.hbm [shape: f32[1,8,128], index: 2, kind: output, shape index: {}]
  %s3 = sld [smem:[#allocation0]]
  $region57: #{tpu_custom_call.1} parent=0
    _
  %s5 = ssub.s32 1, %s3
  %s6 = scalar_select 0, %s5, %s3
  $region1: #{tpu_custom_call.1} parent=0
    #allocation3 [shape = 'u8[8192]{0}', space=vmem, size = 0x2000, scoped, tag = 'input window, operand 0']
    #allocation4 [shape = 's32[2]{0}', space=sflag, size = 0x8, scoped, tag = 'scoped memory for tpu_custom_call.1']
    #allocation5 [shape = 's32[2]{0}', space=sflag, size = 0x8, scoped, tag = 'scoped memory for tpu_custom_call.1']
    #allocation6 [shape = 'u8[8192]{0}', space=vmem, size = 0x2000, scoped, tag = 'input window, operand 1']
    #allocation7 [shape = 's32[2]{0}', space=sflag, size = 0x8, scoped, tag = 'scoped memory for tpu_custom_call.1']
    #allocation8 [shape = 'u8[4096]{0}', space=vmem, size = 0x1000, scoped, tag = 'output window, operand 0, single buffered']
    %7 = vsyncpa [#allocation4], 0
    %s8 = scalar_lea.sflag [#allocation4], 1
    %9 = vsyncpa %s8, 0
    %10 = vsyncpa [#allocation7], 0
    %s11 = scalar_lea.sflag [#allocation7], 1
    %12 = vsyncpa %s11, 0
    %13 = vsyncpa [#allocation5], 0
    loop: start=0, step=1, limit=5
    $region2: #{tpu_custom_call.1} parent=1 // loop_pre_header
      _
    $region3: #{tpu_custom_call.1} parent=1 // loop_header
      %s15 = sphi 0, %s19
      %p16 = scmp.ge.s32.totalorder %s15, 5
      %s22 = sphi 0, %s34
      %s23 = sphi 0, %s30
      %s24 = sphi 0, %s22
      %s25 = sphi 0, %s23
      %s26 = sphi 0, %s24
      %s27 = sphi 0, %s25
      %s45 = sphi 0, %s47
      %s48 = sphi 0, %s45
      %s49 = sphi 0, %s48
      %s65 = sphi 0, %s49
      %s79 = sphi 0, %s81
      %s82 = sphi 0, %s79
      %s83 = sphi 0, %s82
      %s99 = sphi 0, %s83
      %s105 = sphi 0, %s107
      %s108 = sphi 0, %s105
      %s109 = sphi 0, %s108
      %s125 = sphi 0, %s109
    $region4: #{tpu_custom_call.1} parent=1 // loop_header_branch
      %18 = sbr.rel (%p16) target = $region8
    $region5: #{tpu_custom_call.1} parent=1 // loop_body
      %s20 = ssub.s32 %s15, 1
      %s21 = ssub.s32 %s15, 2
      %s28 = sadd.s32 1, %s23
      %p29 = scmp.ge.s32.totalorder %s28, 3
      %s30 = scalar_select %p29, 0, %s28
      %s31 = sadd.s32 1, %s22
      %s32 = scalar_select %p29, %s31, %s22
      %p33 = scmp.ge.s32.totalorder %s32, 1
      %s34 = scalar_select %p33, 0, %s32
      %s35 = smul.u32 %s22, 3
      %s36 = sadd.s32 %s35, %s23
      %p37 = scmp.lt.s32.totalorder %s36, 2
      %s38 = scalar_select %p37, %s36, 2
      %s39 = smul.u32 %s34, 3
      %s40 = sadd.s32 %s39, %s30
      %p41 = scmp.lt.s32.totalorder %s40, 2
      %s42 = scalar_select %p41, %s40, 2
      %s43 = ssub.s32 %s38, %s42
      %p44 = scmp.eq.s32.totalorder %s43, 0
      %s46 = sadd.s32 %s45, 1
      %s47 = scalar_select %p44, %s45, %s46
      %p50 = pneg %p44
      %p51 = scmp.eq.s32.totalorder %s15, 2
      %p52 = por %p50, %p51
      %p53 = scmp.ne.s32.totalorder %s45, %s48
      %p54 = scmp.eq.s32.totalorder %s15, 0
      %p55 = por %p53, %p54
      %p56 = scmp.ne.s32.totalorder %s45, %s48
      %p57 = scmp.eq.s32.totalorder %s20, 2
      %p58 = por %p56, %p57
      %p59 = scmp.ne.s32.totalorder %s48, %s49
      %p60 = scmp.eq.s32.totalorder %s20, 0
      %p61 = por %p59, %p60
      %p62 = scmp.ne.s32.totalorder %s48, %s49
      %p63 = scmp.eq.s32.totalorder %s21, 2
      %p64 = por %p62, %p63
      %p66 = scmp.ne.s32.totalorder %s49, %s65
      %p67 = scmp.eq.s32.totalorder %s21, 0
      %p68 = por %p66, %p67
      %s69 = smul.u32 %s22, 3
      %s70 = sadd.s32 %s69, %s23
      %p71 = scmp.lt.s32.totalorder %s70, 2
      %s72 = scalar_select %p71, %s70, 2
      %s73 = smul.u32 %s34, 3
      %s74 = sadd.s32 %s73, %s30
      %p75 = scmp.lt.s32.totalorder %s74, 2
      %s76 = scalar_select %p75, %s74, 2
      %s77 = ssub.s32 %s72, %s76
      %p78 = scmp.eq.s32.totalorder %s77, 0
      %s80 = sadd.s32 %s79, 1
      %s81 = scalar_select %p78, %s79, %s80
      %p84 = pneg %p78
      %p85 = scmp.eq.s32.totalorder %s15, 2
      %p86 = por %p84, %p85
      %p87 = scmp.ne.s32.totalorder %s79, %s82
      %p88 = scmp.eq.s32.totalorder %s15, 0
      %p89 = por %p87, %p88
      %p90 = scmp.ne.s32.totalorder %s79, %s82
      %p91 = scmp.eq.s32.totalorder %s20, 2
      %p92 = por %p90, %p91
      %p93 = scmp.ne.s32.totalorder %s82, %s83
      %p94 = scmp.eq.s32.totalorder %s20, 0
      %p95 = por %p93, %p94
      %p96 = scmp.ne.s32.totalorder %s82, %s83
      %p97 = scmp.eq.s32.totalorder %s21, 2
      %p98 = por %p96, %p97
      %p100 = scmp.ne.s32.totalorder %s83, %s99
      %p101 = scmp.eq.s32.totalorder %s21, 0
      %p102 = por %p100, %p101
      %s103 = ssub.s32 %s22, %s34
      %p104 = scmp.eq.s32.totalorder %s103, 0
      %s106 = sadd.s32 %s105, 1
      %s107 = scalar_select %p104, %s105, %s106
      %p110 = pneg %p104
      %p111 = scmp.eq.s32.totalorder %s15, 2
      %p112 = por %p110, %p111
      %p113 = scmp.ne.s32.totalorder %s105, %s108
      %p114 = scmp.eq.s32.totalorder %s15, 0
      %p115 = por %p113, %p114
      %p116 = scmp.ne.s32.totalorder %s105, %s108
      %p117 = scmp.eq.s32.totalorder %s20, 2
      %p118 = por %p116, %p117
      %p119 = scmp.ne.s32.totalorder %s108, %s109
      %p120 = scmp.eq.s32.totalorder %s20, 0
      %p121 = por %p119, %p120
      %p122 = scmp.ne.s32.totalorder %s108, %s109
      %p123 = scmp.eq.s32.totalorder %s21, 2
      %p124 = por %p122, %p123
      %p126 = scmp.ne.s32.totalorder %s109, %s125
      %p127 = scmp.eq.s32.totalorder %s21, 0
      %p128 = por %p126, %p127
      %p129 = scmp.le.s32.totalorder 1, %s15
      %p130 = scmp.lt.s32.totalorder %s15, 4
      %p131 = pnand %p129, %p130
      %p132 = pneg %p131
      // Predicated region
      $region9: #{tpu_custom_call.1} parent=5 // pred_check
        _
      $region10: #{tpu_custom_call.1} parent=5 // pred_check_branch
        %134 = sbr.rel (%p131) target = $region12
      $region11: #{tpu_custom_call.1} parent=5 // pred_region
        %s135 = ssub.s32 %s15, 1
      $region12: #{tpu_custom_call.1} parent=5 // pred_fallthru
        _
      %p136 = scmp.lt.s32.totalorder %s15, 3
      // Predicated region
      $region13: #{tpu_custom_call.1} parent=5 // pred_check
        %p137 = pneg %p136
      $region14: #{tpu_custom_call.1} parent=5 // pred_check_branch
        %139 = sbr.rel (%p137) target = $region16
      $region15: #{tpu_custom_call.1} parent=5 // pred_region
        // Predicated region
        $region17: #{tpu_custom_call.1} parent=15 // pred_check
          %p140 = pneg %p55
        $region18: #{tpu_custom_call.1} parent=15 // pred_check_branch
          %142 = sbr.rel (%p140) target = $region20
        $region19: #{tpu_custom_call.1} parent=15 // pred_region
          %s143 = sand.u32 %s45, 1
          %s144 = scalar_lea.sflag [#allocation4], %s143
          %s145 = sand.u32 %s45, 1
          %s146 = smul.addr %s145, 8
          %s147 = scalar_lea.vmem [#allocation3], %s146
          %s148 = smul.u32 %s22, 3
          %s149 = sadd.s32 %s148, %s23
          %p150 = scmp.lt.s32.totalorder %s149, 2
          %s151 = scalar_select %p150, %s149, 2
          %s153 = ssub.s32 128, 128
          %154 = vsyncadd %s144, %s153
          %s155 = smul.addr %s151, 128
          %s156 = scalar_lea.hbm %s0, %s155
          %s158 = sshll.u32 %s147, 4
          %s159 = int_to_ptr.vmem [resolvable:$true] %s158
          %161 = dma.hbm_to_vmem [thread:$0]  %s156, 128, %s159, %s144
        $region20: #{tpu_custom_call.1} parent=15 // pred_fallthru
          _
        // Predicated region
        $region21: #{tpu_custom_call.1} parent=15 // pred_check
          %p162 = pneg %p89
        $region22: #{tpu_custom_call.1} parent=15 // pred_check_branch
          %164 = sbr.rel (%p162) target = $region24
        $region23: #{tpu_custom_call.1} parent=15 // pred_region
          %s165 = sand.u32 %s79, 1
          %s166 = scalar_lea.sflag [#allocation7], %s165
          %s167 = sand.u32 %s79, 1
          %s168 = smul.addr %s167, 8
          %s169 = scalar_lea.vmem [#allocation6], %s168
          %s170 = smul.u32 %s22, 3
          %s171 = sadd.s32 %s170, %s23
          %p172 = scmp.lt.s32.totalorder %s171, 2
          %s173 = scalar_select %p172, %s171, 2
          %s175 = ssub.s32 128, 128
          %176 = vsyncadd %s166, %s175
          %s177 = smul.addr %s173, 128
          %s178 = scalar_lea.hbm %s1, %s177
          %s180 = sshll.u32 %s169, 4
          %s181 = int_to_ptr.vmem [resolvable:$true] %s180
          %183 = dma.hbm_to_vmem [thread:$0]  %s178, 128, %s181, %s166
        $region24: #{tpu_custom_call.1} parent=15 // pred_fallthru
          _
      $region16: #{tpu_custom_call.1} parent=5 // pred_fallthru
        _
      %p184 = scmp.le.s32.totalorder 1, %s15
      %p185 = scmp.lt.s32.totalorder %s15, 4
      %p186 = pnand %p184, %p185
      %p187 = pneg %p186
      // Predicated region
      $region25: #{tpu_custom_call.1} parent=5 // pred_check
        _
      $region26: #{tpu_custom_call.1} parent=5 // pred_check_branch
        %189 = sbr.rel (%p186) target = $region28
      $region27: #{tpu_custom_call.1} parent=5 // pred_region
        %s190 = ssub.s32 %s15, 1
        %s191 = sand.u32 %s48, 1
        %s192 = scalar_lea.sflag [#allocation4], %s191
        %s193 = sand.u32 %s48, 1
        %s194 = smul.addr %s193, 8
        %s195 = scalar_lea.vmem [#allocation3], %s194
        // Predicated region
        $region29: #{tpu_custom_call.1} parent=27 // pred_check
          %p196 = pneg %p61
        $region30: #{tpu_custom_call.1} parent=27 // pred_check_branch
          %198 = sbr.rel (%p196) target = $region32
        $region31: #{tpu_custom_call.1} parent=27 // pred_region
          %199 = dma.done %s192, 128
        $region32: #{tpu_custom_call.1} parent=27 // pred_fallthru
          _
        %s200 = sand.u32 %s82, 1
        %s201 = scalar_lea.sflag [#allocation7], %s200
        %s202 = sand.u32 %s82, 1
        %s203 = smul.addr %s202, 8
        %s204 = scalar_lea.vmem [#allocation6], %s203
        // Predicated region
        $region33: #{tpu_custom_call.1} parent=27 // pred_check
          %p205 = pneg %p95
        $region34: #{tpu_custom_call.1} parent=27 // pred_check_branch
          %207 = sbr.rel (%p205) target = $region36
        $region35: #{tpu_custom_call.1} parent=27 // pred_region
          %208 = dma.done %s201, 128
        $region36: #{tpu_custom_call.1} parent=27 // pred_fallthru
          _
        %s209 = sand.u32 %s48, 1
        %s210 = scalar_lea.sflag [#allocation4], %s209
        %s211 = sand.u32 %s48, 1
        %s212 = smul.addr %s211, 8
        %s213 = scalar_lea.vmem [#allocation3], %s212
        %p214 = pneg %p61
        %p215 = pneg %p58
        %s216 = sand.u32 %s82, 1
        %s217 = scalar_lea.sflag [#allocation7], %s216
        %s218 = sand.u32 %s82, 1
        %s219 = smul.addr %s218, 8
        %s220 = scalar_lea.vmem [#allocation6], %s219
        %p221 = pneg %p95
        %p222 = pneg %p92
        %p223 = pneg %p121
        %p224 = pneg %p118
        %s225 = smul.u32 %s24, 3
        %s226 = sadd.s32 %s225, %s25
        %p227 = scmp.lt.s32.totalorder %s226, 2
        %s228 = scalar_select %p227, %s226, 2
        %s229 = smul.u32 %s24, 3
        %s230 = sadd.s32 %s229, %s25
        %p231 = scmp.lt.s32.totalorder %s230, 2
        %s232 = scalar_select %p231, %s230, 2
        %p233 = scmp.eq.s32.totalorder %s25, 0
        // Predicated region
        $region37: #{tpu_custom_call.1} parent=27 // pred_check
          %p234 = pneg %p233
        $region38: #{tpu_custom_call.1} parent=27 // pred_check_branch
          %236 = sbr.rel (%p234) target = $region40
        $region39: #{tpu_custom_call.1} parent=27 // pred_region
          %vm237 = vcmask 7168
          %238 = vst.msk [vmem:[#allocation2] sm:$0xff] %vm237, 0.0
        $region40: #{tpu_custom_call.1} parent=27 // pred_fallthru
          _
        %v239 = vld [vmem:[%s195] sm:$0xff]
        %v240 = vld [vmem:[%s204] sm:$0xff]
        %s241 = smul.u32 %s24, 3
        %s242 = sadd.s32 %s241, %s25
        %s243 = smul.u32 %s242, 8
        %v244 = vlaneseq
        %v245 = vshrl.u32 %v244, 7
        %v246 = vstv %s243
        %v247 = vadd.s32 %v246, %v245
        %vm248 = vcmp.lt.s32.totalorder %v247, 20
        %249 = vmax.xlane.f32.xlu0 %v239
        %v250 = vpop.xlane.xlu0 %249
        %v251 = vsub.f32 %v239, %v250
        %v252 = vmul.f32 %v251, 1.442695
        %v253 = vpow.pop %v252
        %254 = vadd.xlane.f32.xlu0 %v253
        %v255 = vpop.xlane.xlu0 %254
        %v256 = vlog2.pop %v255
        %v257 = vmul.f32 %v256, 0.6931472
        %v258 = vadd.f32 %v250, %v257
        %v259 = vlaneseq
        %v260 = vand.u32 %v259, 127
        %261 = vset.pattern.permute.xlu0 0
        %262 = vperm.xlu0 %261, %v240
        %v263 = vpop.permute.xlu0 %262
        %vm264 = vcmp.eq.s32.totalorder %v260, %v263
        %v265 = vsel %vm264, %v239, 0.0
        %266 = vadd.xlane.f32.xlu0 %v265
        %v267 = vpop.xlane.xlu0 %266
        %v268 = vsub.f32 %v258, %v267
        %v269 = vld [vmem:[#allocation2] sm:$0xff]
        %v270 = vsel %vm248, %v268, 0.0
        %v271 = vadd.f32 %v269, %v270
        %vm272 = vcmask 7168
        %273 = vst.msk [vmem:[#allocation2] sm:$0xff] %vm272, %v271
        %p274 = scmp.eq.s32.totalorder %s25, 2
        // Predicated region
        $region41: #{tpu_custom_call.1} parent=27 // pred_check
          %p275 = pneg %p274
        $region42: #{tpu_custom_call.1} parent=27 // pred_check_branch
          %277 = sbr.rel (%p275) target = $region44
        $region43: #{tpu_custom_call.1} parent=27 // pred_region
          %v278 = vld [vmem:[#allocation2] sm:$0xff]
          %v279 = vsel %vm272, %v278, 0.0
          %280 = vadd.xlane.f32.xlu0 %v279
          %v281 = vpop.xlane.xlu0 %280
          %v282 = vrot.slane %v281, 4
          %v283 = vadd.f32 %v281, %v282
          %v284 = vrot.slane %v283, 2
          %v285 = vadd.f32 %v283, %v284
          %v286 = vrot.slane %v285, 1
          %v287 = vadd.f32 %v285, %v286
          %s288 = vtos %v287
          %v289 = vstv %s288
          %290 = vst [vmem:[#allocation8] sm:$0xff] %v289
        $region44: #{tpu_custom_call.1} parent=27 // pred_fallthru
          _
        // Predicated region
        $region45: #{tpu_custom_call.1} parent=27 // pred_check
          %p291 = pneg %p118
        $region46: #{tpu_custom_call.1} parent=27 // pred_check_branch
          %293 = sbr.rel (%p291) target = $region48
        $region47: #{tpu_custom_call.1} parent=27 // pred_region
          %s295 = ssub.s32 128, 128
          %296 = vsyncadd [#allocation5], %s295
          %s297 = smul.addr %s24, 128
          %s298 = scalar_lea.hbm %s2, %s297
          %s300 = sshll.u32 [#allocation8], 4
          %s301 = int_to_ptr.vmem [resolvable:$true] %s300
          %303 = dma.vmem_to_hbm [thread:$0]  %s301, 128, %s298, [#allocation5]
        $region48: #{tpu_custom_call.1} parent=27 // pred_fallthru
          _
        // Predicated region
        $region49: #{tpu_custom_call.1} parent=27 // pred_check
          %p304 = pneg %p118
        $region50: #{tpu_custom_call.1} parent=27 // pred_check_branch
          %306 = sbr.rel (%p304) target = $region52
        $region51: #{tpu_custom_call.1} parent=27 // pred_region
          %307 = dma.done [#allocation5], 128
        $region52: #{tpu_custom_call.1} parent=27 // pred_fallthru
          _
      $region28: #{tpu_custom_call.1} parent=5 // pred_fallthru
        _
      %p308 = scmp.le.s32.totalorder 2, %s15
      // Predicated region
      $region53: #{tpu_custom_call.1} parent=5 // pred_check
        %p309 = pneg %p308
      $region54: #{tpu_custom_call.1} parent=5 // pred_check_branch
        %311 = sbr.rel (%p309) target = $region56
      $region55: #{tpu_custom_call.1} parent=5 // pred_region
        %s312 = ssub.s32 %s15, 2
      $region56: #{tpu_custom_call.1} parent=5 // pred_fallthru
        _
    $region6: #{tpu_custom_call.1} parent=1 // loop_footer
      %s19 = sadd.s32 1, %s15
    $region7: #{tpu_custom_call.1} parent=1 // loop_footer_branch
      %14 = sbr.rel target = $region3
    $region8: #{tpu_custom_call.1} parent=1 // loop_exit
      _
    %313 = vsyncpa [#allocation4], 1
    %s314 = scalar_lea.sflag [#allocation4], 1
    %315 = vsyncpa %s314, 1
    %316 = vsyncpa [#allocation7], 1
    %s317 = scalar_lea.sflag [#allocation7], 1
    %318 = vsyncpa %s317, 1
    %319 = vsyncpa [#allocation5], 1
    %s320 = scalar_lea.sflag [#allocation5], 1
    %321 = vsyncpa %s320, 1

</llo_original>
